<compile_context>
chip_gen: v7x
topology: tpu7x:2x2x1
jax: 0.10.0
libtpu: 0.0.40
codegen_flags: <defaults>
</compile_context>

<pallas_src>
import jax
import jax.numpy as jnp
import numpy as np
from jax.experimental import pallas as pl
from jax.experimental.pallas import tpu as pltpu


_SUB = 16  # batch-tile row granularity (covers f32 and 16-bit layouts)


def _round_up(x, m):
    return (x + m - 1) // m * m


def _cdiv(a, b):
    return -(-a // b)


def head_kernel(x_ref, w1_ref, b_ref, w2_ref, out_ref):
    # x_ref: (TB, CP)   w1_ref: (CP, D2)   b_ref: (1, D2) f32
    # w2_ref: (D2, Kp)  out_ref: (TB, Kp)
    x = x_ref[...].astype(w1_ref.dtype)            # no-op when dtypes match
    h = jnp.dot(x, w1_ref[...], preferred_element_type=jnp.float32)
    h = h + b_ref[...]                             # conv bias (broadcast, VALU slack)
    h = jnp.maximum(h, 0.1 * h)                    # LeakyReLU(0.1), one VALU op
    out_ref[...] = jnp.dot(h.astype(w2_ref.dtype), w2_ref[...],
                           preferred_element_type=jnp.float32
                           ).astype(out_ref.dtype)


def prepare_head_params(conv_w, conv_b, fc_w, H, W, compute_dtype=jnp.bfloat16):
    """One-time (parameter-load-time) fold of the Head weights into two
    lane-dense matmul operands plus a broadcast bias row.

    conv_w: (Fo, C)      -- nn.Conv2d(C, Fo, 1).weight squeezed to 2-D
    conv_b: (Fo,)        -- nn.Conv2d bias
    fc_w  : (K, Fo*H*W)  -- nn.Linear(board*Fo, K, bias=False).weight

    Hidden-column order is o*P + p, i.e. exactly PyTorch's h.view(-1, Fo*H*W)
    flatten, so W2 is just fc_w.T (zero-padded).
    """
    conv_w = jnp.asarray(conv_w, jnp.float32)
    conv_b = jnp.asarray(conv_b, jnp.float32)
    fc_w = jnp.asarray(fc_w, jnp.float32)
    Fo, C = conv_w.shape
    K = fc_w.shape[0]
    P = H * W
    CP = C * P
    D2 = _round_up(Fo * P, 128)     # hidden width, lane-dense
    Kp = _round_up(K, 128)          # output width, lane-dense

    # W1[c*P + p, o*P + p] = conv_w[o, c]  (block-diagonal 1x1-conv fold),
    # built with an O(C*P*Fo) scatter -- no dense (C,P,P,Fo) intermediate.
    rows = (jnp.arange(C, dtype=jnp.int32)[:, None, None] * P
            + jnp.arange(P, dtype=jnp.int32)[None, :, None])        # (C, P, 1)
    cols = (jnp.arange(Fo, dtype=jnp.int32)[None, None, :] * P
            + jnp.arange(P, dtype=jnp.int32)[None, :, None])        # (1, P, Fo)
    vals = jnp.broadcast_to(conv_w.T[:, None, :], (C, P, Fo))
    w1 = jnp.zeros((CP, D2), jnp.float32).at[rows, cols].set(vals)

    # bias[o*P + p] = conv_b[o]; kept in f32 (tiny, added to the f32 accumulator)
    bias = jnp.zeros((1, D2), jnp.float32).at[0, :Fo * P].set(jnp.repeat(conv_b, P))

    # W2[o*P + p, k] = fc_w[k, o*P + p]
    w2 = jnp.zeros((D2, Kp), jnp.float32).at[:Fo * P, :K].set(fc_w.T)

    meta = dict(C=C, Fo=Fo, K=K, P=P, CP=CP, D2=D2, Kp=Kp)
    return w1.astype(compute_dtype), bias, w2.astype(compute_dtype), meta


def _choose_batch_tile(B, CP, x_itemsize, *, max_tile, min_tiles, x_vmem_budget):
    # Bytes per batch row of the double-buffered x block (lane-padded in VMEM).
    row_bytes = 2 * _round_up(CP, 128) * x_itemsize
    cap = max(_SUB, min(max_tile, x_vmem_budget // row_bytes) // _SUB * _SUB)
    n_tiles = max(min_tiles, _cdiv(B, cap))          # near-equal tiles, >= min_tiles
    return max(_SUB, _round_up(_cdiv(B, n_tiles), _SUB))


def _vmem_limit_bytes(TB, CP, D2, Kp, x_itemsize, w_itemsize, out_itemsize):
    ru = _round_up
    x_b = 2 * TB * ru(CP, 128) * x_itemsize          # double-buffered x blocks
    w1_b = 2 * ru(CP, _SUB) * D2 * w_itemsize        # worst case: double-buffered
    b_b = 2 * _SUB * D2 * 4                          # f32 bias row
    w2_b = 2 * D2 * Kp * w_itemsize
    out_b = 2 * TB * Kp * out_itemsize               # double-buffered output blocks
    h_b = TB * D2 * 4                                # f32 intermediate
    est = x_b + w1_b + b_b + w2_b + out_b + h_b
    return int(min(max(1.4 * est + (2 << 20), 32 << 20), 120 << 20))


def head_forward(x_nchw, w1, conv_bias, w2, meta, *,
                 max_tile=1024, min_tiles=1, out_dtype=None,
                 x_vmem_budget=8 << 20):
    """Pallas forward pass of Head. x_nchw: (B, C, H, W) in any float dtype.
    Set min_tiles=2 on v7x so the 'parallel' batch axis feeds both TensorCores."""
    B, C, H, W = x_nchw.shape
    CP, D2, Kp, K = meta['CP'], meta['D2'], meta['Kp'], meta['K']
    assert C * H * W == CP, "input does not match the folded weights"
    if out_dtype is None:
        out_dtype = w1.dtype

    # NCHW -> (B, C*H*W) flatten is contiguous => free.  No pad, no concat,
    # no cast: the kernel streams x from HBM exactly once.
    x2d = x_nchw.reshape(B, CP)

    TB = _choose_batch_tile(B, CP, x2d.dtype.itemsize,
                            max_tile=max_tile, min_tiles=min_tiles,
                            x_vmem_budget=x_vmem_budget)
    n_blocks = _cdiv(B, TB)
    vmem_limit = _vmem_limit_bytes(TB, CP, D2, Kp,
                                   x2d.dtype.itemsize, w1.dtype.itemsize,
                                   jnp.dtype(out_dtype).itemsize)

    def build(weight_buffers):
        wkw = ({} if weight_buffers is None
               else dict(pipeline_mode=pl.Buffered(weight_buffers)))
        return pl.pallas_call(
            head_kernel,
            out_shape=jax.ShapeDtypeStruct((B, Kp), out_dtype),
            grid_spec=pltpu.PrefetchScalarGridSpec(
                num_scalar_prefetch=0,
                grid=(n_blocks,),
                in_specs=[
                    # x block: last dim equals the full array dim, so the
                    # (8,128) rule holds without any column padding; ragged
                    # batch boundary blocks are handled by Pallas.
                    pl.BlockSpec((TB, CP), lambda i: (i, 0)),
                    # Constant-index weight blocks -> single-buffered.
                    pl.BlockSpec((CP, D2), lambda i: (0, 0), **wkw),
                    pl.BlockSpec((1, D2), lambda i: (0, 0), **wkw),
                    pl.BlockSpec((D2, Kp), lambda i: (0, 0), **wkw),
                ],
                out_specs=pl.BlockSpec((TB, Kp), lambda i: (i, 0)),
            ),
            compiler_params=pltpu.CompilerParams(
                dimension_semantics=("parallel",),
                vmem_limit_bytes=vmem_limit),
        )

    try:
        out_p = build(1)(x2d, w1, conv_bias, w2)
    except Exception:
        # jax versions without BlockSpec(pipeline_mode=...) support: fall back
        # to default double-buffered weight blocks (VMEM-costlier on v7x only).
        out_p = build(None)(x2d, w1, conv_bias, w2)

    # Lane-dense (B, 128) writeback inside the kernel; the tiny K-column slice
    # happens once here (fuse into the consumer in a real model).
    return out_p[:, :K]


def head_ref(x_nchw, conv_w, conv_b, fc_w):
    """Pure-JAX reference matching the PyTorch module semantics."""
    h = jnp.einsum('oc,bchw->bohw', conv_w, x_nchw) + conv_b[None, :, None, None]
    h = jnp.where(h > 0, h, 0.1 * h)
    return h.reshape(h.shape[0], -1) @ fc_w.T


if __name__ == "__main__":
    # Head(input_size=(4, 3, 3), out_filters=2, outputs=10), batch = 2
    B, C, H, W = 2, 4, 3, 3
    Fo, K = 2, 10

    key = jax.random.PRNGKey(0)
    kx, kw, kb, kf = jax.random.split(key, 4)
    x = jax.random.normal(kx, (B, C, H, W), dtype=jnp.float32)
    # nn.Conv2d(C, Fo, 1).weight -> (Fo, C); nn.Linear -> (K, Fo*H*W)
    conv_w = jax.random.normal(kw, (Fo, C), dtype=jnp.float32) * 0.1
    conv_b = jax.random.normal(kb, (Fo,), dtype=jnp.float32) * 0.1
    fc_w = jax.random.normal(kf, (K, Fo * H * W), dtype=jnp.float32) * 0.1

    ref = head_ref(x, conv_w, conv_b, fc_w)

    # 1) Exact f32 path: matches the PyTorch module to 1e-5.
    w1f, bf, w2f, meta = prepare_head_params(conv_w, conv_b, fc_w, H, W,
                                             compute_dtype=jnp.float32)
    out_f32 = jax.block_until_ready(head_forward(x, w1f, bf, w2f, meta))
    np.testing.assert_allclose(np.asarray(out_f32), np.asarray(ref),
                               rtol=1e-5, atol=1e-5)

    # 2) Default fast path: bf16 operands (x fed as bf16, as an upstream bf16
    #    pipeline would), f32 accumulation, bf16 output -> looser tolerance.
    w1, b1, w2, meta = prepare_head_params(conv_w, conv_b, fc_w, H, W,
                                           compute_dtype=jnp.bfloat16)
    out_bf16 = jax.block_until_ready(
        head_forward(x.astype(jnp.bfloat16), w1, b1, w2, meta))
    np.testing.assert_allclose(np.asarray(out_bf16.astype(jnp.float32)),
                               np.asarray(ref), rtol=2e-2, atol=1e-2)

    print("KERNEL_OK")
</pallas_src>

<mosaic_0001>
module attributes {stable_mosaic.version = 11 : i64} {
  func.func @head_kernel(%arg0: i32, %arg1: memref<16x36xf32, #tpu.memory_space<vmem>>, %arg2: memref<36x128xf32, #tpu.memory_space<vmem>>, %arg3: memref<1x128xf32, #tpu.memory_space<vmem>>, %arg4: memref<128x128xf32, #tpu.memory_space<vmem>>, %arg5: memref<16x128xf32, #tpu.memory_space<vmem>>) attributes {dimension_semantics = [#tpu.dimension_semantics<parallel>], iteration_bounds = array<i64: 1>, scalar_prefetch = 0 : i64, scratch_operands = 0 : i64, tpu.core_type = #tpu.core_type<tc>, window_params = [{transform_indices = @transform_0, window_bounds = array<i64: 16, 36>}, {pipeline_mode = #tpu.pipeline_mode<synchronous>, transform_indices = @transform_1, window_bounds = array<i64: 36, 128>}, {pipeline_mode = #tpu.pipeline_mode<synchronous>, transform_indices = @transform_2, window_bounds = array<i64: 1, 128>}, {pipeline_mode = #tpu.pipeline_mode<synchronous>, transform_indices = @transform_3, window_bounds = array<i64: 128, 128>}, {transform_indices = @transform_4, window_bounds = array<i64: 16, 128>}]} {
    %c0 = arith.constant 0 : index
    %c0_0 = arith.constant 0 : index
    %0 = vector.load %arg1[%c0, %c0_0] : memref<16x36xf32, #tpu.memory_space<vmem>>, vector<16x36xf32>
    %c0_1 = arith.constant 0 : index
    %c0_2 = arith.constant 0 : index
    %1 = vector.load %arg2[%c0_1, %c0_2] : memref<36x128xf32, #tpu.memory_space<vmem>>, vector<36x128xf32>
    %cst = arith.constant dense<0.000000e+00> : vector<16x128xf32>
    %2 = tpu.matmul %0, %1, %cst {dimension_numbers = #tpu.dot_dimension_numbers<[1], [0], [0], [1], [0, 0, 1, 1], [], []>} : vector<16x36xf32>, vector<36x128xf32>, vector<16x128xf32> -> vector<16x128xf32>
    %c0_3 = arith.constant 0 : index
    %c0_4 = arith.constant 0 : index
    %3 = vector.load %arg3[%c0_3, %c0_4] : memref<1x128xf32, #tpu.memory_space<vmem>>, vector<1x128xf32>
    %4 = vector.broadcast %3 : vector<1x128xf32> to vector<16x128xf32>
    %5 = arith.addf %2, %4 : vector<16x128xf32>
    %cst_5 = arith.constant 1.000000e-01 : f32
    %6 = vector.broadcast %cst_5 : f32 to vector<16x128xf32>
    %7 = arith.mulf %6, %5 : vector<16x128xf32>
    %8 = arith.maximumf %5, %7 : vector<16x128xf32>
    %c0_6 = arith.constant 0 : index
    %c0_7 = arith.constant 0 : index
    %9 = vector.load %arg4[%c0_6, %c0_7] : memref<128x128xf32, #tpu.memory_space<vmem>>, vector<128x128xf32>
    %cst_8 = arith.constant dense<0.000000e+00> : vector<16x128xf32>
    %10 = tpu.matmul %8, %9, %cst_8 {dimension_numbers = #tpu.dot_dimension_numbers<[1], [0], [0], [1], [0, 0, 1, 1], [], []>} : vector<16x128xf32>, vector<128x128xf32>, vector<16x128xf32> -> vector<16x128xf32>
    %c0_9 = arith.constant 0 : index
    %c0_10 = arith.constant 0 : index
    %11 = vector.load %arg5[%c0_9, %c0_10] : memref<16x128xf32, #tpu.memory_space<vmem>>, vector<16x128xf32>
    tpu.vector_store %arg5[%c0_9, %c0_10], %10 {strides = array<i32>} : memref<16x128xf32, #tpu.memory_space<vmem>>, vector<16x128xf32>,
    return
  }
  func.func @transform_0(%arg0: i32) -> (i32, i32) {
    %c0_i32 = arith.constant 0 : i32
    %c0_i32_0 = arith.constant 0 : i32
    return %arg0, %c0_i32 : i32, i32
  }
  func.func @transform_1(%arg0: i32) -> (i32, i32) {
    %c0_i32 = arith.constant 0 : i32
    %c0_i32_0 = arith.constant 0 : i32
    %c0_i32_1 = arith.constant 0 : i32
    return %c0_i32, %c0_i32_0 : i32, i32
  }
  func.func @transform_2(%arg0: i32) -> (i32, i32) {
    %c0_i32 = arith.constant 0 : i32
    %c0_i32_0 = arith.constant 0 : i32
    %c0_i32_1 = arith.constant 0 : i32
    return %c0_i32, %c0_i32_0 : i32, i32
  }
  func.func @transform_3(%arg0: i32) -> (i32, i32) {
    %c0_i32 = arith.constant 0 : i32
    %c0_i32_0 = arith.constant 0 : i32
    %c0_i32_1 = arith.constant 0 : i32
    return %c0_i32, %c0_i32_0 : i32, i32
  }
  func.func @transform_4(%arg0: i32) -> (i32, i32) {
    %c0_i32 = arith.constant 0 : i32
    %c0_i32_0 = arith.constant 0 : i32
    return %arg0, %c0_i32 : i32, i32
  }
}

module attributes {stable_mosaic.version = 11 : i64} {
  func.func @head_kernel(%arg0: i32, %arg1: memref<16x36xf32, #tpu.memory_space<vmem>>, %arg2: memref<36x128xf32, #tpu.memory_space<vmem>>, %arg3: memref<1x128xf32, #tpu.memory_space<vmem>>, %arg4: memref<128x128xf32, #tpu.memory_space<vmem>>, %arg5: memref<16x128xf32, #tpu.memory_space<vmem>>) attributes {dimension_semantics = [#tpu.dimension_semantics<parallel>], iteration_bounds = array<i64: 1>, scalar_prefetch = 0 : i64, scratch_operands = 0 : i64, tpu.core_type = #tpu.core_type<tc>, window_params = [{transform_indices = @transform_0, window_bounds = array<i64: 16, 36>}, {pipeline_mode = #tpu.pipeline_mode<synchronous>, transform_indices = @transform_1, window_bounds = array<i64: 36, 128>}, {pipeline_mode = #tpu.pipeline_mode<synchronous>, transform_indices = @transform_2, window_bounds = array<i64: 1, 128>}, {pipeline_mode = #tpu.pipeline_mode<synchronous>, transform_indices = @transform_3, window_bounds = array<i64: 128, 128>}, {transform_indices = @transform_4, window_bounds = array<i64: 16, 128>}]} {
    %c0 = arith.constant 0 : index
    %c0_0 = arith.constant 0 : index
    %0 = vector.load %arg1[%c0, %c0_0] : memref<16x36xf32, #tpu.memory_space<vmem>>, vector<16x36xf32>
    %c0_1 = arith.constant 0 : index
    %c0_2 = arith.constant 0 : index
    %1 = vector.load %arg2[%c0_1, %c0_2] : memref<36x128xf32, #tpu.memory_space<vmem>>, vector<36x128xf32>
    %cst = arith.constant dense<0.000000e+00> : vector<16x128xf32>
    %2 = tpu.matmul %0, %1, %cst {dimension_numbers = #tpu.dot_dimension_numbers<[1], [0], [0], [1], [0, 0, 1, 1], [], []>} : vector<16x36xf32>, vector<36x128xf32>, vector<16x128xf32> -> vector<16x128xf32>
    %c0_3 = arith.constant 0 : index
    %c0_4 = arith.constant 0 : index
    %3 = vector.load %arg3[%c0_3, %c0_4] : memref<1x128xf32, #tpu.memory_space<vmem>>, vector<1x128xf32>
    %4 = vector.broadcast %3 : vector<1x128xf32> to vector<16x128xf32>
    %5 = arith.addf %2, %4 : vector<16x128xf32>
    %cst_5 = arith.constant 1.000000e-01 : f32
    %6 = vector.broadcast %cst_5 : f32 to vector<16x128xf32>
    %7 = arith.mulf %6, %5 : vector<16x128xf32>
    %8 = arith.maximumf %5, %7 : vector<16x128xf32>
    %c0_6 = arith.constant 0 : index
    %c0_7 = arith.constant 0 : index
    %9 = vector.load %arg4[%c0_6, %c0_7] : memref<128x128xf32, #tpu.memory_space<vmem>>, vector<128x128xf32>
    %cst_8 = arith.constant dense<0.000000e+00> : vector<16x128xf32>
    %10 = tpu.matmul %8, %9, %cst_8 {dimension_numbers = #tpu.dot_dimension_numbers<[1], [0], [0], [1], [0, 0, 1, 1], [], []>} : vector<16x128xf32>, vector<128x128xf32>, vector<16x128xf32> -> vector<16x128xf32>
    %c0_9 = arith.constant 0 : index
    %c0_10 = arith.constant 0 : index
    %11 = vector.load %arg5[%c0_9, %c0_10] : memref<16x128xf32, #tpu.memory_space<vmem>>, vector<16x128xf32>
    tpu.vector_store %arg5[%c0_9, %c0_10], %10 {strides = array<i32>} : memref<16x128xf32, #tpu.memory_space<vmem>>, vector<16x128xf32>,
    return
  }
  func.func @transform_0(%arg0: i32) -> (i32, i32) {
    %c0_i32 = arith.constant 0 : i32
    %c0_i32_0 = arith.constant 0 : i32
    return %arg0, %c0_i32 : i32, i32
  }
  func.func @transform_1(%arg0: i32) -> (i32, i32) {
    %c0_i32 = arith.constant 0 : i32
    %c0_i32_0 = arith.constant 0 : i32
    %c0_i32_1 = arith.constant 0 : i32
    return %c0_i32, %c0_i32_0 : i32, i32
  }
  func.func @transform_2(%arg0: i32) -> (i32, i32) {
    %c0_i32 = arith.constant 0 : i32
    %c0_i32_0 = arith.constant 0 : i32
    %c0_i32_1 = arith.constant 0 : i32
    return %c0_i32, %c0_i32_0 : i32, i32
  }
  func.func @transform_3(%arg0: i32) -> (i32, i32) {
    %c0_i32 = arith.constant 0 : i32
    %c0_i32_0 = arith.constant 0 : i32
    %c0_i32_1 = arith.constant 0 : i32
    return %c0_i32, %c0_i32_0 : i32, i32
  }
  func.func @transform_4(%arg0: i32) -> (i32, i32) {
    %c0_i32 = arith.constant 0 : i32
    %c0_i32_0 = arith.constant 0 : i32
    return %arg0, %c0_i32 : i32, i32
  }
}

</mosaic_0001>

<llo_original>
// kernel: tpu_custom_call.1
$region0: #{tpu_custom_call.1}
  #allocation0 [shape = 'u32[]', space=smem, size = 0x4, offset = 0x4, fixed_abs, tag = 'smem constant byte address 0x4 - core index']
  #allocation1 [shape = 'u32[144,128]{1,0:T(1,128)}', space=vmem, size = 0x12000, scoped, tag = 'internal scratch']
  %s0 = inlined_call_operand.hbm [shape: f32[2,36], index: 0, kind: input, shape index: {}]
  %s1 = inlined_call_operand.hbm [shape: f32[36,128], index: 1, kind: input, shape index: {}]
  %s2 = inlined_call_operand.vmem [shape: f32[1,128], index: 2, kind: input, shape index: {}]
  %s3 = inlined_call_operand.hbm [shape: f32[128,128], index: 3, kind: input, shape index: {}]
  %s4 = inlined_call_operand.hbm [shape: f32[2,128], index: 4, kind: output, shape index: {}]
  %s5 = sld [smem:[#allocation0]]
  $region38: #{tpu_custom_call.1} parent=0
    _
  %s7 = ssub.s32 1, %s5
  %s8 = scalar_select 0, %s7, %s5
  $region1: #{tpu_custom_call.1} parent=0
    #allocation2 [shape = 'u8[8192]{0}', space=vmem, size = 0x2000, scoped, tag = 'input window, operand 0, single buffered']
    #allocation3 [shape = 's32[1]{0}', space=sflag, size = 0x4, scoped, tag = 'scoped memory for tpu_custom_call.1']
    #allocation4 [shape = 's32[1]{0}', space=sflag, size = 0x4, scoped, tag = 'scoped memory for tpu_custom_call.1']
    #allocation5 [shape = 'u8[20480]{0}', space=vmem, size = 0x5000, scoped, tag = 'input window, operand 1, single buffered']
    #allocation6 [shape = 's32[1]{0}', space=sflag, size = 0x4, scoped, tag = 'scoped memory for tpu_custom_call.1']
    #allocation7 [shape = 'u8[65536]{0}', space=vmem, size = 0x10000, scoped, tag = 'input window, operand 3, single buffered']
    #allocation8 [shape = 'u8[8192]{0}', space=vmem, size = 0x2000, scoped, tag = 'output window, operand 0, single buffered']
    %9 = vsyncpa [#allocation3], 0
    %10 = vsyncpa [#allocation6], 0
    %11 = vsyncpa [#allocation4], 0
    // Predicated region
    $region2: #{tpu_custom_call.1} parent=1 // pred_check
      _
    $region3: #{tpu_custom_call.1} parent=1 // pred_check_branch
      %13 = sbr.rel (0) target = $region5
    $region4: #{tpu_custom_call.1} parent=1 // pred_region
      %s15 = ssub.s32 256, 32
      %16 = vsyncadd [#allocation3], %s15
      %s17 = sshll.u32 [#allocation2], 4
      %s18 = int_to_ptr.vmem [resolvable:$true] %s17
      %23 = dma.hbm_to_vmem [thread:$0]  %s0, 32, %s18, [#allocation3], 32, 32, 2
    $region5: #{tpu_custom_call.1} parent=1 // pred_fallthru
      _
    // Predicated region
    $region6: #{tpu_custom_call.1} parent=1 // pred_check
      _
    $region7: #{tpu_custom_call.1} parent=1 // pred_check_branch
      %25 = sbr.rel (0) target = $region9
    $region8: #{tpu_custom_call.1} parent=1 // pred_region
      %s27 = ssub.s32 640, 640
      %28 = vsyncadd [#allocation6], %s27
      %s29 = sshll.u32 [#allocation5], 4
      %s30 = int_to_ptr.vmem [resolvable:$true] %s29
      %35 = dma.hbm_to_vmem [thread:$0]  %s1, 640, %s30, [#allocation6], 128, 128, 8
    $region9: #{tpu_custom_call.1} parent=1 // pred_fallthru
      _
    // Predicated region
    $region10: #{tpu_custom_call.1} parent=1 // pred_check
      _
    $region11: #{tpu_custom_call.1} parent=1 // pred_check_branch
      %37 = sbr.rel (0) target = $region13
    $region12: #{tpu_custom_call.1} parent=1 // pred_region
      _
    $region13: #{tpu_custom_call.1} parent=1 // pred_fallthru
      _
    // Predicated region
    $region14: #{tpu_custom_call.1} parent=1 // pred_check
      _
    $region15: #{tpu_custom_call.1} parent=1 // pred_check_branch
      %39 = sbr.rel (0) target = $region17
    $region16: #{tpu_custom_call.1} parent=1 // pred_region
      %s41 = ssub.s32 2048, 2048
      %42 = vsyncadd [#allocation6], %s41
      %s43 = sshll.u32 [#allocation7], 4
      %s44 = int_to_ptr.vmem [resolvable:$true] %s43
      %49 = dma.hbm_to_vmem [thread:$0]  %s3, 2048, %s44, [#allocation6], 128, 128, 8
    $region17: #{tpu_custom_call.1} parent=1 // pred_fallthru
      _
    // Predicated region
    $region18: #{tpu_custom_call.1} parent=1 // pred_check
      _
    $region19: #{tpu_custom_call.1} parent=1 // pred_check_branch
      %51 = sbr.rel (0) target = $region21
    $region20: #{tpu_custom_call.1} parent=1 // pred_region
      %52 = dma.done [#allocation3], 256
    $region21: #{tpu_custom_call.1} parent=1 // pred_fallthru
      _
    // Predicated region
    $region22: #{tpu_custom_call.1} parent=1 // pred_check
      _
    $region23: #{tpu_custom_call.1} parent=1 // pred_check_branch
      %54 = sbr.rel (0) target = $region25
    $region24: #{tpu_custom_call.1} parent=1 // pred_region
      %55 = dma.done [#allocation6], 640
    $region25: #{tpu_custom_call.1} parent=1 // pred_fallthru
      _
    // Predicated region
    $region26: #{tpu_custom_call.1} parent=1 // pred_check
      _
    $region27: #{tpu_custom_call.1} parent=1 // pred_check_branch
      %57 = sbr.rel (0) target = $region29
    $region28: #{tpu_custom_call.1} parent=1 // pred_region
      %58 = dma.done [#allocation6], 2048
    $region29: #{tpu_custom_call.1} parent=1 // pred_fallthru
      _
    %v59 = vld [vmem:[#allocation2] sm:$0xff]
    %v60 = vld [vmem:[#allocation2 + $0x8] sm:$0xff]
    %v61 = vld [vmem:[#allocation5] sm:$0xff]
    %v62 = vld [vmem:[#allocation5 + $0x8] sm:$0xff]
    %v63 = vld [vmem:[#allocation5 + $0x10] sm:$0xff]
    %v64 = vld [vmem:[#allocation5 + $0x18] sm:$0xff]
    %v65 = vld [vmem:[#allocation5 + $0x20] sm:$0xf]
    %v66 = vld [vmem:[%s2] sm:$0x1]
    %v68 = vlaneseq
    %v69 = vshrl.u32 %v68, 7
    %v70 = vsub.s32 0, %v69
    %v71 = vrot.slane %v66, %v70
    %vm73 = vcmask 293888
    %v75 = vsel %vm73, %v59, 0
    %v78 = vsel %vm73, %v60, 0
    %vm80 = vcmask 1043456
    %v82 = vsel %vm80, %v65, 0
    %84 = vmatprep.subr.mxu0 0.0
    %85 = vmatpush1.msra.mxu0 %v61
    %86 = vmatprep.subr.mxu0 0.0
    %87 = vmatpush1.msra.mxu0 %v62
    %88 = vmatprep.subr.mxu0 0.0
    %89 = vmatpush1.msra.mxu0 %v63
    %90 = vmatprep.subr.mxu0 0.0
    %91 = vmatpush1.msra.mxu0 %v64
    %92 = vmatprep.subr.mxu0 0.0
    %93 = vmatpush1.msra.mxu0 %v82
    %94 = vmatprep.subr.mxu0 0.0
    %95 = vmatpush1.msra.mxu0 0.0
    %96 = vmatprep.subr.mxu0 0.0
    %97 = vmatpush1.msra.mxu0 0.0
    %98 = vmatprep.subr.mxu0 0.0
    %99 = vmatpush1.msra.mxu0 0.0
    %100 = vmatprep.subr.mxu0 0.0
    %101 = vmatpush1.msra.mxu0 0.0
    %102 = vmatprep.subr.mxu0 0.0
    %103 = vmatpush1.msra.mxu0 0.0
    %104 = vmatprep.subr.mxu0 0.0
    %105 = vmatpush1.msra.mxu0 0.0
    %106 = vmatprep.subr.mxu0 0.0
    %107 = vmatpush1.msra.mxu0 0.0
    %108 = vmatprep.subr.mxu0 0.0
    %109 = vmatpush1.msra.mxu0 0.0
    %110 = vmatprep.subr.mxu0 0.0
    %111 = vmatpush1.msra.mxu0 0.0
    %112 = vmatprep.subr.mxu0 0.0
    %113 = vmatpush1.msra.mxu0 0.0
    %114 = vmatprep.subr.mxu0 0.0
    %115 = vmatpush1.msra.mxu0 0.0
    %116 = vmatprep.subr.mxu0 0.0
    %117 = vmatpush1.msra.mxu0 0.0
    %118 = vmatprep.subr.mxu0 0.0
    %119 = vmatpush1.msra.mxu0 0.0
    %120 = vmatprep.subr.mxu0 0.0
    %121 = vmatpush1.msra.mxu0 0.0
    %122 = vmatprep.subr.mxu0 0.0
    %123 = vmatpush1.msra.mxu0 0.0
    %124 = vmatprep.subr.mxu0 0.0
    %125 = vmatpush1.msra.mxu0 0.0
    %126 = vmatprep.subr.mxu0 0.0
    %127 = vmatpush1.msra.mxu0 0.0
    %128 = vmatprep.subr.mxu0 0.0
    %129 = vmatpush1.msra.mxu0 0.0
    %130 = vmatprep.subr.mxu0 0.0
    %131 = vmatpush1.msra.mxu0 0.0
    %132 = vmatprep.subr.mxu0 0.0
    %133 = vmatpush1.msra.mxu0 0.0
    %134 = vmatprep.subr.mxu0 0.0
    %135 = vmatpush1.msra.mxu0 0.0
    %136 = vmatprep.subr.mxu0 0.0
    %137 = vmatpush1.msra.mxu0 0.0
    %138 = vmatprep.subr.mxu0 0.0
    %139 = vmatpush1.msra.mxu0 0.0
    %140 = vmatprep.subr.mxu0 0.0
    %141 = vmatpush1.msra.mxu0 0.0
    %142 = vmatprep.subr.mxu0 0.0
    %143 = vmatpush1.msra.mxu0 0.0
    %144 = vmatprep.subr.mxu0 0.0
    %145 = vmatpush1.msra.mxu0 0.0
    %146 = vmatprep.subr.mxu0 0.0
    %147 = vmatpush1.msra.mxu0 0.0
    %148 = vmatprep.mubr.f32.mxu0 0.0
    %149 = vmatmul.mubr.f32.gmra.mrb[0].mxu0 %v75
    %v150 = vpop.f32.mrb[0].mxu0
    %v151 = vadd.f32 %v71, %v150
    %v152 = vpop.f32.mrb[0].mxu0
    %153 = vmatprep.mubr.f32.mxu0 0.0
    %154 = vmatmul.mubr.f32.gmra.mrb[0].mxu0 %v78
    %v155 = vpop.f32.mrb[0].mxu0
    %v156 = vadd.f32 %v71, %v155
    %v157 = vpop.f32.mrb[0].mxu0
    %158 = vdwg.mxu0
    %v159 = vmul.f32 %v151, 0.1
    %v160 = vmul.f32 %v156, 0.1
    %v161 = vmax.f32 %v151, %v159
    %v162 = vmax.f32 %v156, %v160
    %v163 = vld [vmem:[#allocation7] sm:$0xff]
    %v164 = vld [vmem:[#allocation7 + $0x8] sm:$0xff]
    %v165 = vld [vmem:[#allocation7 + $0x10] sm:$0xff]
    %v166 = vld [vmem:[#allocation7 + $0x18] sm:$0xff]
    %v167 = vld [vmem:[#allocation7 + $0x20] sm:$0xff]
    %v168 = vld [vmem:[#allocation7 + $0x28] sm:$0xff]
    %v169 = vld [vmem:[#allocation7 + $0x30] sm:$0xff]
    %v170 = vld [vmem:[#allocation7 + $0x38] sm:$0xff]
    %v171 = vld [vmem:[#allocation7 + $0x40] sm:$0xff]
    %v172 = vld [vmem:[#allocation7 + $0x48] sm:$0xff]
    %v173 = vld [vmem:[#allocation7 + $0x50] sm:$0xff]
    %v174 = vld [vmem:[#allocation7 + $0x58] sm:$0xff]
    %v175 = vld [vmem:[#allocation7 + $0x60] sm:$0xff]
    %v176 = vld [vmem:[#allocation7 + $0x68] sm:$0xff]
    %v177 = vld [vmem:[#allocation7 + $0x70] sm:$0xff]
    %v178 = vld [vmem:[#allocation7 + $0x78] sm:$0xff]
    %179 = vmatprep.subr.mxu0 0.0
    %180 = vmatpush1.msra.mxu0 %v163
    %181 = vmatprep.subr.mxu0 0.0
    %182 = vmatpush1.msra.mxu0 %v164
    %183 = vmatprep.subr.mxu0 0.0
    %184 = vmatpush1.msra.mxu0 %v165
    %185 = vmatprep.subr.mxu0 0.0
    %186 = vmatpush1.msra.mxu0 %v166
    %187 = vmatprep.subr.mxu0 0.0
    %188 = vmatpush1.msra.mxu0 %v167
    %189 = vmatprep.subr.mxu0 0.0
    %190 = vmatpush1.msra.mxu0 %v168
    %191 = vmatprep.subr.mxu0 0.0
    %192 = vmatpush1.msra.mxu0 %v169
    %193 = vmatprep.subr.mxu0 0.0
    %194 = vmatpush1.msra.mxu0 %v170
    %195 = vmatprep.subr.mxu0 0.0
    %196 = vmatpush1.msra.mxu0 %v171
    %197 = vmatprep.subr.mxu0 0.0
    %198 = vmatpush1.msra.mxu0 %v172
    %199 = vmatprep.subr.mxu0 0.0
    %200 = vmatpush1.msra.mxu0 %v173
    %201 = vmatprep.subr.mxu0 0.0
    %202 = vmatpush1.msra.mxu0 %v174
    %203 = vmatprep.subr.mxu0 0.0
    %204 = vmatpush1.msra.mxu0 %v175
    %205 = vmatprep.subr.mxu0 0.0
    %206 = vmatpush1.msra.mxu0 %v176
    %207 = vmatprep.subr.mxu0 0.0
    %208 = vmatpush1.msra.mxu0 %v177
    %209 = vmatprep.subr.mxu0 0.0
    %210 = vmatpush1.msra.mxu0 %v178
    %211 = vmatprep.subr.mxu0 0.0
    %212 = vmatpush1.msra.mxu0 0.0
    %213 = vmatprep.subr.mxu0 0.0
    %214 = vmatpush1.msra.mxu0 0.0
    %215 = vmatprep.subr.mxu0 0.0
    %216 = vmatpush1.msra.mxu0 0.0
    %217 = vmatprep.subr.mxu0 0.0
    %218 = vmatpush1.msra.mxu0 0.0
    %219 = vmatprep.subr.mxu0 0.0
    %220 = vmatpush1.msra.mxu0 0.0
    %221 = vmatprep.subr.mxu0 0.0
    %222 = vmatpush1.msra.mxu0 0.0
    %223 = vmatprep.subr.mxu0 0.0
    %224 = vmatpush1.msra.mxu0 0.0
    %225 = vmatprep.subr.mxu0 0.0
    %226 = vmatpush1.msra.mxu0 0.0
    %227 = vmatprep.subr.mxu0 0.0
    %228 = vmatpush1.msra.mxu0 0.0
    %229 = vmatprep.subr.mxu0 0.0
    %230 = vmatpush1.msra.mxu0 0.0
    %231 = vmatprep.subr.mxu0 0.0
    %232 = vmatpush1.msra.mxu0 0.0
    %233 = vmatprep.subr.mxu0 0.0
    %234 = vmatpush1.msra.mxu0 0.0
    %235 = vmatprep.subr.mxu0 0.0
    %236 = vmatpush1.msra.mxu0 0.0
    %237 = vmatprep.subr.mxu0 0.0
    %238 = vmatpush1.msra.mxu0 0.0
    %239 = vmatprep.subr.mxu0 0.0
    %240 = vmatpush1.msra.mxu0 0.0
    %241 = vmatprep.subr.mxu0 0.0
    %242 = vmatpush1.msra.mxu0 0.0
    %243 = vmatprep.mubr.f32.mxu0 0.0
    %244 = vmatmul.mubr.f32.gmra.mrb[0].mxu0 %v161
    %v245 = vpop.f32.mrb[0].mxu0
    %v246 = vadd.f32 0.0, %v245
    %v247 = vpop.f32.mrb[0].mxu0
    %248 = vmatprep.mubr.f32.mxu0 0.0
    %249 = vmatmul.mubr.f32.gmra.mrb[0].mxu0 %v162
    %v250 = vpop.f32.mrb[0].mxu0
    %v251 = vadd.f32 0.0, %v250
    %v252 = vpop.f32.mrb[0].mxu0
    %253 = vdwg.mxu0
    %254 = vst [vmem:[#allocation8] sm:$0xff] %v246
    %255 = vst [vmem:[#allocation8 + $0x8] sm:$0xff] %v251
    // Predicated region
    $region30: #{tpu_custom_call.1} parent=1 // pred_check
      _
    $region31: #{tpu_custom_call.1} parent=1 // pred_check_branch
      %257 = sbr.rel (0) target = $region33
    $region32: #{tpu_custom_call.1} parent=1 // pred_region
      %s259 = ssub.s32 256, 32
      %260 = vsyncadd [#allocation4], %s259
      %s261 = sshll.u32 [#allocation8], 4
      %s262 = int_to_ptr.vmem [resolvable:$true] %s261
      %267 = dma.vmem_to_hbm [thread:$0]  %s262, 32, %s4, [#allocation4], 32, 32, 2
    $region33: #{tpu_custom_call.1} parent=1 // pred_fallthru
      _
    // Predicated region
    $region34: #{tpu_custom_call.1} parent=1 // pred_check
      _
    $region35: #{tpu_custom_call.1} parent=1 // pred_check_branch
      %269 = sbr.rel (0) target = $region37
    $region36: #{tpu_custom_call.1} parent=1 // pred_region
      %270 = dma.done [#allocation4], 256
    $region37: #{tpu_custom_call.1} parent=1 // pred_fallthru
      _
    %271 = vsyncpa [#allocation3], 1
    %272 = vsyncpa [#allocation6], 1
    %273 = vsyncpa [#allocation4], 1

// kernel: tpu_custom_call.1
$region0: #{tpu_custom_call.1}
  #allocation0 [shape = 'u32[]', space=smem, size = 0x4, offset = 0x4, fixed_abs, tag = 'smem constant byte address 0x4 - core index']
  #allocation1 [shape = 'u32[144,128]{1,0:T(1,128)}', space=vmem, size = 0x12000, scoped, tag = 'internal scratch']
  %s0 = inlined_call_operand.hbm [shape: f32[2,36], index: 0, kind: input, shape index: {}]
  %s1 = inlined_call_operand.hbm [shape: f32[36,128], index: 1, kind: input, shape index: {}]
  %s2 = inlined_call_operand.vmem [shape: f32[1,128], index: 2, kind: input, shape index: {}]
  %s3 = inlined_call_operand.hbm [shape: f32[128,128], index: 3, kind: input, shape index: {}]
  %s4 = inlined_call_operand.hbm [shape: f32[2,128], index: 4, kind: output, shape index: {}]
  %s5 = sld [smem:[#allocation0]]
  $region38: #{tpu_custom_call.1} parent=0
    _
  %s7 = ssub.s32 1, %s5
  %s8 = scalar_select 0, %s7, %s5
  $region1: #{tpu_custom_call.1} parent=0
    #allocation2 [shape = 'u8[8192]{0}', space=vmem, size = 0x2000, scoped, tag = 'input window, operand 0, single buffered']
    #allocation3 [shape = 's32[1]{0}', space=sflag, size = 0x4, scoped, tag = 'scoped memory for tpu_custom_call.1']
    #allocation4 [shape = 's32[1]{0}', space=sflag, size = 0x4, scoped, tag = 'scoped memory for tpu_custom_call.1']
    #allocation5 [shape = 'u8[20480]{0}', space=vmem, size = 0x5000, scoped, tag = 'input window, operand 1, single buffered']
    #allocation6 [shape = 's32[1]{0}', space=sflag, size = 0x4, scoped, tag = 'scoped memory for tpu_custom_call.1']
    #allocation7 [shape = 'u8[65536]{0}', space=vmem, size = 0x10000, scoped, tag = 'input window, operand 3, single buffered']
    #allocation8 [shape = 'u8[8192]{0}', space=vmem, size = 0x2000, scoped, tag = 'output window, operand 0, single buffered']
    %9 = vsyncpa [#allocation3], 0
    %10 = vsyncpa [#allocation6], 0
    %11 = vsyncpa [#allocation4], 0
    // Predicated region
    $region2: #{tpu_custom_call.1} parent=1 // pred_check
      _
    $region3: #{tpu_custom_call.1} parent=1 // pred_check_branch
      %13 = sbr.rel (0) target = $region5
    $region4: #{tpu_custom_call.1} parent=1 // pred_region
      %s15 = ssub.s32 256, 32
      %16 = vsyncadd [#allocation3], %s15
      %s17 = sshll.u32 [#allocation2], 4
      %s18 = int_to_ptr.vmem [resolvable:$true] %s17
      %23 = dma.hbm_to_vmem [thread:$0]  %s0, 32, %s18, [#allocation3], 32, 32, 2
    $region5: #{tpu_custom_call.1} parent=1 // pred_fallthru
      _
    // Predicated region
    $region6: #{tpu_custom_call.1} parent=1 // pred_check
      _
    $region7: #{tpu_custom_call.1} parent=1 // pred_check_branch
      %25 = sbr.rel (0) target = $region9
    $region8: #{tpu_custom_call.1} parent=1 // pred_region
      %s27 = ssub.s32 640, 640
      %28 = vsyncadd [#allocation6], %s27
      %s29 = sshll.u32 [#allocation5], 4
      %s30 = int_to_ptr.vmem [resolvable:$true] %s29
      %35 = dma.hbm_to_vmem [thread:$0]  %s1, 640, %s30, [#allocation6], 128, 128, 8
    $region9: #{tpu_custom_call.1} parent=1 // pred_fallthru
      _
    // Predicated region
    $region10: #{tpu_custom_call.1} parent=1 // pred_check
      _
    $region11: #{tpu_custom_call.1} parent=1 // pred_check_branch
      %37 = sbr.rel (0) target = $region13
    $region12: #{tpu_custom_call.1} parent=1 // pred_region
      _
    $region13: #{tpu_custom_call.1} parent=1 // pred_fallthru
      _
    // Predicated region
    $region14: #{tpu_custom_call.1} parent=1 // pred_check
      _
    $region15: #{tpu_custom_call.1} parent=1 // pred_check_branch
      %39 = sbr.rel (0) target = $region17
    $region16: #{tpu_custom_call.1} parent=1 // pred_region
      %s41 = ssub.s32 2048, 2048
      %42 = vsyncadd [#allocation6], %s41
      %s43 = sshll.u32 [#allocation7], 4
      %s44 = int_to_ptr.vmem [resolvable:$true] %s43
      %49 = dma.hbm_to_vmem [thread:$0]  %s3, 2048, %s44, [#allocation6], 128, 128, 8
    $region17: #{tpu_custom_call.1} parent=1 // pred_fallthru
      _
    // Predicated region
    $region18: #{tpu_custom_call.1} parent=1 // pred_check
      _
    $region19: #{tpu_custom_call.1} parent=1 // pred_check_branch
      %51 = sbr.rel (0) target = $region21
    $region20: #{tpu_custom_call.1} parent=1 // pred_region
      %52 = dma.done [#allocation3], 256
    $region21: #{tpu_custom_call.1} parent=1 // pred_fallthru
      _
    // Predicated region
    $region22: #{tpu_custom_call.1} parent=1 // pred_check
      _
    $region23: #{tpu_custom_call.1} parent=1 // pred_check_branch
      %54 = sbr.rel (0) target = $region25
    $region24: #{tpu_custom_call.1} parent=1 // pred_region
      %55 = dma.done [#allocation6], 640
    $region25: #{tpu_custom_call.1} parent=1 // pred_fallthru
      _
    // Predicated region
    $region26: #{tpu_custom_call.1} parent=1 // pred_check
      _
    $region27: #{tpu_custom_call.1} parent=1 // pred_check_branch
      %57 = sbr.rel (0) target = $region29
    $region28: #{tpu_custom_call.1} parent=1 // pred_region
      %58 = dma.done [#allocation6], 2048
    $region29: #{tpu_custom_call.1} parent=1 // pred_fallthru
      _
    %v59 = vld [vmem:[#allocation2] sm:$0xff]
    %v60 = vld [vmem:[#allocation2 + $0x8] sm:$0xff]
    %v61 = vld [vmem:[#allocation5] sm:$0xff]
    %v62 = vld [vmem:[#allocation5 + $0x8] sm:$0xff]
    %v63 = vld [vmem:[#allocation5 + $0x10] sm:$0xff]
    %v64 = vld [vmem:[#allocation5 + $0x18] sm:$0xff]
    %v65 = vld [vmem:[#allocation5 + $0x20] sm:$0xf]
    %v66 = vld [vmem:[%s2] sm:$0x1]
    %v68 = vlaneseq
    %v69 = vshrl.u32 %v68, 7
    %v70 = vsub.s32 0, %v69
    %v71 = vrot.slane %v66, %v70
    %vm73 = vcmask 293888
    %v75 = vsel %vm73, %v59, 0
    %v78 = vsel %vm73, %v60, 0
    %vm80 = vcmask 1043456
    %v82 = vsel %vm80, %v65, 0
    %84 = vmatprep.subr.mxu0 0.0
    %85 = vmatpush1.msra.mxu0 %v61
    %86 = vmatprep.subr.mxu0 0.0
    %87 = vmatpush1.msra.mxu0 %v62
    %88 = vmatprep.subr.mxu0 0.0
    %89 = vmatpush1.msra.mxu0 %v63
    %90 = vmatprep.subr.mxu0 0.0
    %91 = vmatpush1.msra.mxu0 %v64
    %92 = vmatprep.subr.mxu0 0.0
    %93 = vmatpush1.msra.mxu0 %v82
    %94 = vmatprep.subr.mxu0 0.0
    %95 = vmatpush1.msra.mxu0 0.0
    %96 = vmatprep.subr.mxu0 0.0
    %97 = vmatpush1.msra.mxu0 0.0
    %98 = vmatprep.subr.mxu0 0.0
    %99 = vmatpush1.msra.mxu0 0.0
    %100 = vmatprep.subr.mxu0 0.0
    %101 = vmatpush1.msra.mxu0 0.0
    %102 = vmatprep.subr.mxu0 0.0
    %103 = vmatpush1.msra.mxu0 0.0
    %104 = vmatprep.subr.mxu0 0.0
    %105 = vmatpush1.msra.mxu0 0.0
    %106 = vmatprep.subr.mxu0 0.0
    %107 = vmatpush1.msra.mxu0 0.0
    %108 = vmatprep.subr.mxu0 0.0
    %109 = vmatpush1.msra.mxu0 0.0
    %110 = vmatprep.subr.mxu0 0.0
    %111 = vmatpush1.msra.mxu0 0.0
    %112 = vmatprep.subr.mxu0 0.0
    %113 = vmatpush1.msra.mxu0 0.0
    %114 = vmatprep.subr.mxu0 0.0
    %115 = vmatpush1.msra.mxu0 0.0
    %116 = vmatprep.subr.mxu0 0.0
    %117 = vmatpush1.msra.mxu0 0.0
    %118 = vmatprep.subr.mxu0 0.0
    %119 = vmatpush1.msra.mxu0 0.0
    %120 = vmatprep.subr.mxu0 0.0
    %121 = vmatpush1.msra.mxu0 0.0
    %122 = vmatprep.subr.mxu0 0.0
    %123 = vmatpush1.msra.mxu0 0.0
    %124 = vmatprep.subr.mxu0 0.0
    %125 = vmatpush1.msra.mxu0 0.0
    %126 = vmatprep.subr.mxu0 0.0
    %127 = vmatpush1.msra.mxu0 0.0
    %128 = vmatprep.subr.mxu0 0.0
    %129 = vmatpush1.msra.mxu0 0.0
    %130 = vmatprep.subr.mxu0 0.0
    %131 = vmatpush1.msra.mxu0 0.0
    %132 = vmatprep.subr.mxu0 0.0
    %133 = vmatpush1.msra.mxu0 0.0
    %134 = vmatprep.subr.mxu0 0.0
    %135 = vmatpush1.msra.mxu0 0.0
    %136 = vmatprep.subr.mxu0 0.0
    %137 = vmatpush1.msra.mxu0 0.0
    %138 = vmatprep.subr.mxu0 0.0
    %139 = vmatpush1.msra.mxu0 0.0
    %140 = vmatprep.subr.mxu0 0.0
    %141 = vmatpush1.msra.mxu0 0.0
    %142 = vmatprep.subr.mxu0 0.0
    %143 = vmatpush1.msra.mxu0 0.0
    %144 = vmatprep.subr.mxu0 0.0
    %145 = vmatpush1.msra.mxu0 0.0
    %146 = vmatprep.subr.mxu0 0.0
    %147 = vmatpush1.msra.mxu0 0.0
    %148 = vmatprep.mubr.f32.mxu0 0.0
    %149 = vmatmul.mubr.f32.gmra.mrb[0].mxu0 %v75
    %v150 = vpop.f32.mrb[0].mxu0
    %v151 = vadd.f32 %v71, %v150
    %v152 = vpop.f32.mrb[0].mxu0
    %153 = vmatprep.mubr.f32.mxu0 0.0
    %154 = vmatmul.mubr.f32.gmra.mrb[0].mxu0 %v78
    %v155 = vpop.f32.mrb[0].mxu0
    %v156 = vadd.f32 %v71, %v155
    %v157 = vpop.f32.mrb[0].mxu0
    %158 = vdwg.mxu0
    %v159 = vmul.f32 %v151, 0.1
    %v160 = vmul.f32 %v156, 0.1
    %v161 = vmax.f32 %v151, %v159
    %v162 = vmax.f32 %v156, %v160
    %v163 = vld [vmem:[#allocation7] sm:$0xff]
    %v164 = vld [vmem:[#allocation7 + $0x8] sm:$0xff]
    %v165 = vld [vmem:[#allocation7 + $0x10] sm:$0xff]
    %v166 = vld [vmem:[#allocation7 + $0x18] sm:$0xff]
    %v167 = vld [vmem:[#allocation7 + $0x20] sm:$0xff]
    %v168 = vld [vmem:[#allocation7 + $0x28] sm:$0xff]
    %v169 = vld [vmem:[#allocation7 + $0x30] sm:$0xff]
    %v170 = vld [vmem:[#allocation7 + $0x38] sm:$0xff]
    %v171 = vld [vmem:[#allocation7 + $0x40] sm:$0xff]
    %v172 = vld [vmem:[#allocation7 + $0x48] sm:$0xff]
    %v173 = vld [vmem:[#allocation7 + $0x50] sm:$0xff]
    %v174 = vld [vmem:[#allocation7 + $0x58] sm:$0xff]
    %v175 = vld [vmem:[#allocation7 + $0x60] sm:$0xff]
    %v176 = vld [vmem:[#allocation7 + $0x68] sm:$0xff]
    %v177 = vld [vmem:[#allocation7 + $0x70] sm:$0xff]
    %v178 = vld [vmem:[#allocation7 + $0x78] sm:$0xff]
    %179 = vmatprep.subr.mxu0 0.0
    %180 = vmatpush1.msra.mxu0 %v163
    %181 = vmatprep.subr.mxu0 0.0
    %182 = vmatpush1.msra.mxu0 %v164
    %183 = vmatprep.subr.mxu0 0.0
    %184 = vmatpush1.msra.mxu0 %v165
    %185 = vmatprep.subr.mxu0 0.0
    %186 = vmatpush1.msra.mxu0 %v166
    %187 = vmatprep.subr.mxu0 0.0
    %188 = vmatpush1.msra.mxu0 %v167
    %189 = vmatprep.subr.mxu0 0.0
    %190 = vmatpush1.msra.mxu0 %v168
    %191 = vmatprep.subr.mxu0 0.0
    %192 = vmatpush1.msra.mxu0 %v169
    %193 = vmatprep.subr.mxu0 0.0
    %194 = vmatpush1.msra.mxu0 %v170
    %195 = vmatprep.subr.mxu0 0.0
    %196 = vmatpush1.msra.mxu0 %v171
    %197 = vmatprep.subr.mxu0 0.0
    %198 = vmatpush1.msra.mxu0 %v172
    %199 = vmatprep.subr.mxu0 0.0
    %200 = vmatpush1.msra.mxu0 %v173
    %201 = vmatprep.subr.mxu0 0.0
    %202 = vmatpush1.msra.mxu0 %v174
    %203 = vmatprep.subr.mxu0 0.0
    %204 = vmatpush1.msra.mxu0 %v175
    %205 = vmatprep.subr.mxu0 0.0
    %206 = vmatpush1.msra.mxu0 %v176
    %207 = vmatprep.subr.mxu0 0.0
    %208 = vmatpush1.msra.mxu0 %v177
    %209 = vmatprep.subr.mxu0 0.0
    %210 = vmatpush1.msra.mxu0 %v178
    %211 = vmatprep.subr.mxu0 0.0
    %212 = vmatpush1.msra.mxu0 0.0
    %213 = vmatprep.subr.mxu0 0.0
    %214 = vmatpush1.msra.mxu0 0.0
    %215 = vmatprep.subr.mxu0 0.0
    %216 = vmatpush1.msra.mxu0 0.0
    %217 = vmatprep.subr.mxu0 0.0
    %218 = vmatpush1.msra.mxu0 0.0
    %219 = vmatprep.subr.mxu0 0.0
    %220 = vmatpush1.msra.mxu0 0.0
    %221 = vmatprep.subr.mxu0 0.0
    %222 = vmatpush1.msra.mxu0 0.0
    %223 = vmatprep.subr.mxu0 0.0
    %224 = vmatpush1.msra.mxu0 0.0
    %225 = vmatprep.subr.mxu0 0.0
    %226 = vmatpush1.msra.mxu0 0.0
    %227 = vmatprep.subr.mxu0 0.0
    %228 = vmatpush1.msra.mxu0 0.0
    %229 = vmatprep.subr.mxu0 0.0
    %230 = vmatpush1.msra.mxu0 0.0
    %231 = vmatprep.subr.mxu0 0.0
    %232 = vmatpush1.msra.mxu0 0.0
    %233 = vmatprep.subr.mxu0 0.0
    %234 = vmatpush1.msra.mxu0 0.0
    %235 = vmatprep.subr.mxu0 0.0
    %236 = vmatpush1.msra.mxu0 0.0
    %237 = vmatprep.subr.mxu0 0.0
    %238 = vmatpush1.msra.mxu0 0.0
    %239 = vmatprep.subr.mxu0 0.0
    %240 = vmatpush1.msra.mxu0 0.0
    %241 = vmatprep.subr.mxu0 0.0
    %242 = vmatpush1.msra.mxu0 0.0
    %243 = vmatprep.mubr.f32.mxu0 0.0
    %244 = vmatmul.mubr.f32.gmra.mrb[0].mxu0 %v161
    %v245 = vpop.f32.mrb[0].mxu0
    %v246 = vadd.f32 0.0, %v245
    %v247 = vpop.f32.mrb[0].mxu0
    %248 = vmatprep.mubr.f32.mxu0 0.0
    %249 = vmatmul.mubr.f32.gmra.mrb[0].mxu0 %v162
    %v250 = vpop.f32.mrb[0].mxu0
    %v251 = vadd.f32 0.0, %v250
    %v252 = vpop.f32.mrb[0].mxu0
    %253 = vdwg.mxu0
    %254 = vst [vmem:[#allocation8] sm:$0xff] %v246
    %255 = vst [vmem:[#allocation8 + $0x8] sm:$0xff] %v251
    // Predicated region
    $region30: #{tpu_custom_call.1} parent=1 // pred_check
      _
    $region31: #{tpu_custom_call.1} parent=1 // pred_check_branch
      %257 = sbr.rel (0) target = $region33
    $region32: #{tpu_custom_call.1} parent=1 // pred_region
      %s259 = ssub.s32 256, 32
      %260 = vsyncadd [#allocation4], %s259
      %s261 = sshll.u32 [#allocation8], 4
      %s262 = int_to_ptr.vmem [resolvable:$true] %s261
      %267 = dma.vmem_to_hbm [thread:$0]  %s262, 32, %s4, [#allocation4], 32, 32, 2
    $region33: #{tpu_custom_call.1} parent=1 // pred_fallthru
      _
    // Predicated region
    $region34: #{tpu_custom_call.1} parent=1 // pred_check
      _
    $region35: #{tpu_custom_call.1} parent=1 // pred_check_branch
      %269 = sbr.rel (0) target = $region37
    $region36: #{tpu_custom_call.1} parent=1 // pred_region
      %270 = dma.done [#allocation4], 256
    $region37: #{tpu_custom_call.1} parent=1 // pred_fallthru
      _
    %271 = vsyncpa [#allocation3], 1
    %272 = vsyncpa [#allocation6], 1
    %273 = vsyncpa [#allocation4], 1

</llo_original>
